<compile_context>
chip_gen: v7x
topology: tpu7x:2x2x1
jax: 0.10.0
libtpu: 0.0.40
codegen_flags: <defaults>
</compile_context>

<pallas_src>
import jax
import jax.numpy as jnp
import numpy as np
from jax.experimental import pallas as pl
from jax.experimental.pallas import tpu as pltpu

# Module hyper-parameters (from PINN.py)
INPUT_SIZE = 60
HIDDEN_SIZE = 64
OUTPUT_SIZE = 10          # forecast_steps
HPM_HIDDEN = 4

TM_DEFAULT = 2048         # row tile (rows = batch*seq)


def _round_up(n, m):
    return ((n + m - 1) // m) * m


def _pick_tile(n_rows, tm_max):
    """Row tile: multiple of 16 (bf16 sublane packing); prefer a tile that
    divides n_rows exactly so no row padding / wrapper [:N] slice is needed."""
    tm_max = max(16, (int(tm_max) // 16) * 16)
    n16 = _round_up(n_rows, 16)
    if n16 <= tm_max:
        return n16
    for cand in range(tm_max, 15, -16):
        if n_rows % cand == 0:
            return cand
    return tm_max


def linear_pinn_kernel(x_ref, wx_ref, why_ref, wgr_ref, w1d_ref, vec_ref,
                       y_ref, f_ref, fo_ref):
    f32 = jnp.float32
    bf16 = jnp.bfloat16
    H = HIDDEN_SIZE

    x = x_ref[...].astype(bf16)                                    # (TM, 60)

    # Stage 1: fused x-LHS matmul -> [linear1 pre-act | hpm.layer1 x-part]
    p = jnp.dot(x, wx_ref[...], preferred_element_type=f32)        # (TM, 128)

    h = jnp.tanh(p[:, :H] + vec_ref[0:1, :H])                      # (TM, 64)
    dh2 = 1.0 - h * h

    # Stage 2: fused h-LHS matmul -> [linear2(h) | folded (h->q) y-chain]
    hy = jnp.dot(h.astype(bf16), why_ref[...], preferred_element_type=f32)
    y_ref[...] = (hy[:, :OUTPUT_SIZE]
                  + vec_ref[3:4, :OUTPUT_SIZE]).astype(y_ref.dtype)

    # HPM hidden pre-act: q = x@W1gx^T + y@W1gy^T + b1g
    # (y-chain folded into `why` lanes 64:68; its bias folded into vec row 1)
    q = (p + hy)[:, H:] + vec_ref[1:2, :H]                         # (TM, 64)
    g = jnp.tanh(q)
    dg = 1.0 - g * g

    # Stage 3: fused [g | dg] matmul -> [G | r_x | s | 0]          (TM, 256)
    gd = jnp.concatenate([g, dg], axis=-1).astype(bf16)            # (TM, 128)
    grs = jnp.dot(gd, wgr_ref[...], preferred_element_type=f32)
    g_rx = grs[:, :2 * H]                                          # [G | r_x]
    s = grs[:, 2 * H:3 * H]                                        # (TM, 64)

    # Stage 4: block-diagonal @W1 -> [a1 | a2]
    #   F     = a1 - G - b2g,  a1 = (dh2*u) @ W1
    #   F_out = a2 - r_x,      a2 = ((-2*vu*h - s) * dh2) @ W1
    u = vec_ref[4:5, :H]      # colsum(W2)
    vu = vec_ref[5:6, :H]     # colsum(W2) * rowsum(W1)
    lhs = jnp.concatenate([dh2 * u, (-2.0 * vu * h - s) * dh2],
                          axis=-1).astype(bf16)                    # (TM, 128)
    a = jnp.dot(lhs, w1d_ref[...], preferred_element_type=f32)     # (TM, 128)

    slab = a - g_rx - vec_ref[2:3, :]                              # [F | F_out]
    f_ref[...] = slab[:, :INPUT_SIZE].astype(f_ref.dtype)
    fo_ref[...] = slab[:, H:H + INPUT_SIZE].astype(fo_ref.dtype)


def init_params(key):
    """Deterministic parameters mimicking PyTorch nn.Linear default init."""
    def linear_init(k, fan_in, fan_out):
        bound = 1.0 / np.sqrt(fan_in)
        kw, kb = jax.random.split(k)
        w = jax.random.uniform(kw, (fan_out, fan_in), jnp.float32, -bound, bound)
        b = jax.random.uniform(kb, (fan_out,), jnp.float32, -bound, bound)
        return w, b

    k1, k2, k3, k4 = jax.random.split(key, 4)
    w1, b1 = linear_init(k1, INPUT_SIZE, HIDDEN_SIZE)                  # linear1
    w2, b2 = linear_init(k2, HIDDEN_SIZE, OUTPUT_SIZE)                 # linear2
    w1g, b1g = linear_init(k3, INPUT_SIZE + OUTPUT_SIZE, HPM_HIDDEN)   # hpm.layer1
    w2g, b2g = linear_init(k4, HPM_HIDDEN, INPUT_SIZE)                 # hpm.layer2
    return dict(w1=w1, b1=b1, w2=w2, b2=b2, w1g=w1g, b1g=b1g, w2g=w2g, b2g=b2g)


def _prepare_operands(params):
    """Fuse / pad / pre-multiply weights once on the host-XLA side.

    Zero-padding invariants the kernel relies on (hold by construction since
    every slab starts from jnp.zeros):
      * wx cols 68:128, why cols 10:64 and 68:128 are zero;
      * wgr rows 4:64 and 68:128 are zero (so tanh(0)=0 / dg=1 padding lanes
        contribute nothing); cols 60:64, 124:128 and 192:256 are zero;
      * w1d off-diagonal blocks and W1's padded columns are zero;
      * vec row 2 lanes 60:128 are zero (b2g must not leak into F_out).
    """
    I, H, O, Hg = INPUT_SIZE, HIDDEN_SIZE, OUTPUT_SIZE, HPM_HIDDEN
    f32, bf = jnp.float32, jnp.bfloat16
    w1, b1 = params["w1"], params["b1"]            # (64,60), (64,)
    w2, b2 = params["w2"], params["b2"]            # (10,64), (10,)
    w1g, b1g = params["w1g"], params["b1g"]        # (4,70),  (4,)
    w2g, b2g = params["w2g"], params["b2g"]        # (60,4),  (60,)
    w1gx, w1gy = w1g[:, :I], w1g[:, I:]            # (4,60), (4,10)

    # Stage 1 RHS: x -> [W1^T | W1gx^T]                                (60, 128)
    wx = jnp.zeros((I, 2 * H), f32)
    wx = wx.at[:, :H].set(w1.T).at[:, H:H + Hg].set(w1gx.T)

    # Stage 2 RHS: h -> [W2^T (output) | W2^T @ W1gy^T (q y-chain)]    (64, 128)
    why = jnp.zeros((H, 2 * H), f32)
    why = why.at[:, :O].set(w2.T).at[:, H:H + Hg].set(w2.T @ w1gy.T)

    # Stage 3 RHS: [g | dg] -> [G | r_x | s | 0]                       (128, 256)
    wg = jnp.sum(w2g, axis=0)                                   # colsum(W2g)
    wgr = jnp.zeros((2 * H, 4 * H), f32)
    wgr = wgr.at[:Hg, :I].set(w2g.T)                            # g  -> G
    wgr = wgr.at[H:H + Hg, H:H + I].set(wg[:, None] * w1gx)     # dg -> r_x
    wgr = wgr.at[H:H + Hg, 2 * H:3 * H].set(wg[:, None] * (w1gy @ w2))  # dg -> s

    # Stage 4 RHS: blockdiag(W1, W1), W1 cols padded 60 -> 64          (128, 128)
    w1p = jnp.zeros((H, H), f32).at[:, :I].set(w1)
    w1d = jnp.zeros((2 * H, 2 * H), f32)
    w1d = w1d.at[:H, :H].set(w1p).at[H:, H:].set(w1p)

    # Small bias / weight-derived vectors, one (8, 128) f32 slab.
    u = jnp.sum(w2, axis=0)                                     # (64,)
    vu = u * jnp.sum(w1, axis=1)                                # (64,)
    vec = jnp.zeros((8, 2 * H), f32)
    vec = vec.at[0, :H].set(b1)
    vec = vec.at[1, :Hg].set(b1g + b2 @ w1gy.T)                 # folded q bias
    vec = vec.at[2, :I].set(b2g)
    vec = vec.at[3, :O].set(b2)
    vec = vec.at[4, :H].set(u)
    vec = vec.at[5, :H].set(vu)

    return (wx.astype(bf), why.astype(bf), wgr.astype(bf), w1d.astype(bf), vec)


def linear_pinn_forward(x, params, tm=TM_DEFAULT, out_dtype=jnp.bfloat16):
    """x: (B, S, INPUT_SIZE) float32 -> (output, F, F_out) in `out_dtype`."""
    B, S, I = x.shape
    assert I == INPUT_SIZE
    N = B * S

    tm = _pick_tile(N, tm)
    n_pad = _round_up(N, tm)

    x2 = x.reshape(N, I)                      # free reshape; bf16 cast in-kernel
    if n_pad != N:
        x2 = jnp.pad(x2, ((0, n_pad - N), (0, 0)))

    ops = _prepare_operands(params)

    def full(arr):
        return pl.BlockSpec(arr.shape, lambda i: (0, 0))

    in_specs = [pl.BlockSpec((tm, I), lambda i: (i, 0))] + [full(o) for o in ops]
    out_specs = (pl.BlockSpec((tm, OUTPUT_SIZE), lambda i: (i, 0)),   # output
                 pl.BlockSpec((tm, I), lambda i: (i, 0)),             # F
                 pl.BlockSpec((tm, I), lambda i: (i, 0)))             # F_out
    out_shape = (jax.ShapeDtypeStruct((n_pad, OUTPUT_SIZE), out_dtype),
                 jax.ShapeDtypeStruct((n_pad, I), out_dtype),
                 jax.ShapeDtypeStruct((n_pad, I), out_dtype))

    y, f, fout = pl.pallas_call(
        linear_pinn_kernel,
        out_shape=out_shape,
        grid_spec=pltpu.PrefetchScalarGridSpec(
            num_scalar_prefetch=0,
            grid=(n_pad // tm,),
            in_specs=in_specs,
            out_specs=out_specs,
        ),
        compiler_params=pltpu.CompilerParams(
            dimension_semantics=("parallel",)),
    )(x2, *ops)

    if n_pad != N:
        y, f, fout = y[:N], f[:N], fout[:N]
    return (y.reshape(B, S, OUTPUT_SIZE),
            f.reshape(B, S, I),
            fout.reshape(B, S, I))


# ---------------------------------------------------------------------------
# Pure-JAX reference (uses autodiff exactly like the PyTorch module)
# ---------------------------------------------------------------------------
def reference_forward(x, params):
    B, S, I = x.shape
    xf = x.reshape(B * S, I)
    w1, b1 = params["w1"], params["b1"]
    w2, b2 = params["w2"], params["b2"]
    w1g, b1g = params["w1g"], params["b1g"]
    w2g, b2g = params["w2g"], params["b2g"]

    def net_y(xx):
        h = jnp.tanh(xx @ w1.T + b1)
        return h @ w2.T + b2

    def out_in_fn(xx):
        return jax.grad(lambda z: jnp.sum(net_y(z)))(xx)

    def hpm_fn(xx):
        yy = net_y(xx)
        z = jnp.concatenate([xx, yy], axis=-1)
        g = jnp.tanh(z @ w1g.T + b1g)
        return g @ w2g.T + b2g

    def f_fn(xx):
        return out_in_fn(xx) - hpm_fn(xx)

    y = net_y(xf)
    f = f_fn(xf)
    fout = jax.grad(lambda z: jnp.sum(f_fn(z)))(xf)
    return (y.reshape(B, S, OUTPUT_SIZE),
            f.reshape(B, S, I),
            fout.reshape(B, S, I))


if __name__ == "__main__":
    key = jax.random.PRNGKey(0)
    kp, kx = jax.random.split(key)
    params = init_params(kp)

    B, S = 2, 8                      # batch=2, seq=8, feature=input_size=60
    x = jax.random.normal(kx, (B, S, INPUT_SIZE), jnp.float32)

    fwd = jax.jit(lambda xx: linear_pinn_forward(xx, params))
    out = jax.block_until_ready(fwd(x))
    ref = reference_forward(x, params)

    # bf16 MXU operands / bf16 outputs vs. an all-f32 autodiff reference.
    for a, b in zip(out, ref):
        np.testing.assert_allclose(np.asarray(a).astype(np.float32),
                                   np.asarray(b), rtol=5e-2, atol=5e-2)

    print("KERNEL_OK")
</pallas_src>

<mosaic_0001>
module attributes {stable_mosaic.version = 11 : i64} {
  func.func @linear_pinn_kernel(%arg0: i32, %arg1: memref<16x60xf32, #tpu.memory_space<vmem>>, %arg2: memref<60x128xbf16, #tpu.memory_space<vmem>>, %arg3: memref<64x128xbf16, #tpu.memory_space<vmem>>, %arg4: memref<128x256xbf16, #tpu.memory_space<vmem>>, %arg5: memref<128x128xbf16, #tpu.memory_space<vmem>>, %arg6: memref<8x128xf32, #tpu.memory_space<vmem>>, %arg7: memref<16x10xbf16, #tpu.memory_space<vmem>>, %arg8: memref<16x60xbf16, #tpu.memory_space<vmem>>, %arg9: memref<16x60xbf16, #tpu.memory_space<vmem>>) attributes {dimension_semantics = [#tpu.dimension_semantics<parallel>], iteration_bounds = array<i64: 1>, scalar_prefetch = 0 : i64, scratch_operands = 0 : i64, tpu.core_type = #tpu.core_type<tc>, window_params = [{transform_indices = @transform_0, window_bounds = array<i64: 16, 60>}, {pipeline_mode = #tpu.pipeline_mode<synchronous>, transform_indices = @transform_1, window_bounds = array<i64: 60, 128>}, {pipeline_mode = #tpu.pipeline_mode<synchronous>, transform_indices = @transform_2, window_bounds = array<i64: 64, 128>}, {pipeline_mode = #tpu.pipeline_mode<synchronous>, transform_indices = @transform_3, window_bounds = array<i64: 128, 256>}, {pipeline_mode = #tpu.pipeline_mode<synchronous>, transform_indices = @transform_4, window_bounds = array<i64: 128, 128>}, {pipeline_mode = #tpu.pipeline_mode<synchronous>, transform_indices = @transform_5, window_bounds = array<i64: 8, 128>}, {transform_indices = @transform_6, window_bounds = array<i64: 16, 10>}, {transform_indices = @transform_7, window_bounds = array<i64: 16, 60>}, {transform_indices = @transform_8, window_bounds = array<i64: 16, 60>}]} {
    %c0 = arith.constant 0 : index
    %c0_0 = arith.constant 0 : index
    %0 = vector.load %arg1[%c0, %c0_0] : memref<16x60xf32, #tpu.memory_space<vmem>>, vector<16x60xf32>
    %1 = arith.truncf %0 : vector<16x60xf32> to vector<16x60xbf16>
    %c0_1 = arith.constant 0 : index
    %c0_2 = arith.constant 0 : index
    %2 = vector.load %arg2[%c0_1, %c0_2] : memref<60x128xbf16, #tpu.memory_space<vmem>>, vector<60x128xbf16>
    %cst = arith.constant dense<0.000000e+00> : vector<16x128xf32>
    %3 = tpu.matmul %1, %2, %cst {dimension_numbers = #tpu.dot_dimension_numbers<[1], [0], [0], [1], [0, 0, 1, 1], [], []>} : vector<16x60xbf16>, vector<60x128xbf16>, vector<16x128xf32> -> vector<16x128xf32>
    %4 = vector.extract_strided_slice %3 {offsets = [0, 0], sizes = [16, 64], strides = [1, 1]} : vector<16x128xf32> to vector<16x64xf32>
    %c0_3 = arith.constant 0 : index
    %c0_4 = arith.constant 0 : index
    %5 = vector.load %arg6[%c0_3, %c0_4] : memref<8x128xf32, #tpu.memory_space<vmem>>, vector<1x64xf32>
    %6 = vector.broadcast %5 : vector<1x64xf32> to vector<16x64xf32>
    %7 = arith.addf %4, %6 : vector<16x64xf32>
    %8 = math.tanh %7 : vector<16x64xf32>
    %9 = arith.mulf %8, %8 : vector<16x64xf32>
    %cst_5 = arith.constant 1.000000e+00 : f32
    %10 = vector.broadcast %cst_5 : f32 to vector<16x64xf32>
    %11 = arith.subf %10, %9 : vector<16x64xf32>
    %12 = arith.truncf %8 : vector<16x64xf32> to vector<16x64xbf16>
    %c0_6 = arith.constant 0 : index
    %c0_7 = arith.constant 0 : index
    %13 = vector.load %arg3[%c0_6, %c0_7] : memref<64x128xbf16, #tpu.memory_space<vmem>>, vector<64x128xbf16>
    %cst_8 = arith.constant dense<0.000000e+00> : vector<16x128xf32>
    %14 = tpu.matmul %12, %13, %cst_8 {dimension_numbers = #tpu.dot_dimension_numbers<[1], [0], [0], [1], [0, 0, 1, 1], [], []>} : vector<16x64xbf16>, vector<64x128xbf16>, vector<16x128xf32> -> vector<16x128xf32>
    %15 = vector.extract_strided_slice %14 {offsets = [0, 0], sizes = [16, 10], strides = [1, 1]} : vector<16x128xf32> to vector<16x10xf32>
    %c3 = arith.constant 3 : index
    %c0_9 = arith.constant 0 : index
    %16 = vector.load %arg6[%c3, %c0_9] : memref<8x128xf32, #tpu.memory_space<vmem>>, vector<1x10xf32>
    %17 = vector.broadcast %16 : vector<1x10xf32> to vector<16x10xf32>
    %18 = arith.addf %15, %17 : vector<16x10xf32>
    %19 = arith.truncf %18 : vector<16x10xf32> to vector<16x10xbf16>
    %c0_10 = arith.constant 0 : index
    %c0_11 = arith.constant 0 : index
    %20 = vector.load %arg7[%c0_10, %c0_11] : memref<16x10xbf16, #tpu.memory_space<vmem>>, vector<16x10xbf16>
    tpu.vector_store %arg7[%c0_10, %c0_11], %19 {strides = array<i32>} : memref<16x10xbf16, #tpu.memory_space<vmem>>, vector<16x10xbf16>,
    %21 = arith.addf %3, %14 : vector<16x128xf32>
    %22 = vector.extract_strided_slice %21 {offsets = [0, 64], sizes = [16, 64], strides = [1, 1]} : vector<16x128xf32> to vector<16x64xf32>
    %c1 = arith.constant 1 : index
    %c0_12 = arith.constant 0 : index
    %23 = vector.load %arg6[%c1, %c0_12] : memref<8x128xf32, #tpu.memory_space<vmem>>, vector<1x64xf32>
    %24 = vector.broadcast %23 : vector<1x64xf32> to vector<16x64xf32>
    %25 = arith.addf %22, %24 : vector<16x64xf32>
    %26 = math.tanh %25 : vector<16x64xf32>
    %27 = arith.mulf %26, %26 : vector<16x64xf32>
    %cst_13 = arith.constant 1.000000e+00 : f32
    %28 = vector.broadcast %cst_13 : f32 to vector<16x64xf32>
    %29 = arith.subf %28, %27 : vector<16x64xf32>
    %30 = tpu.concatenate %26, %29 in 1 : vector<16x64xf32>, vector<16x64xf32> -> vector<16x128xf32>
    %31 = arith.truncf %30 : vector<16x128xf32> to vector<16x128xbf16>
    %c0_14 = arith.constant 0 : index
    %c0_15 = arith.constant 0 : index
    %32 = vector.load %arg4[%c0_14, %c0_15] : memref<128x256xbf16, #tpu.memory_space<vmem>>, vector<128x256xbf16>
    %cst_16 = arith.constant dense<0.000000e+00> : vector<16x256xf32>
    %33 = tpu.matmul %31, %32, %cst_16 {dimension_numbers = #tpu.dot_dimension_numbers<[1], [0], [0], [1], [0, 0, 1, 1], [], []>} : vector<16x128xbf16>, vector<128x256xbf16>, vector<16x256xf32> -> vector<16x256xf32>
    %34 = vector.extract_strided_slice %33 {offsets = [0, 0], sizes = [16, 128], strides = [1, 1]} : vector<16x256xf32> to vector<16x128xf32>
    %35 = vector.extract_strided_slice %33 {offsets = [0, 128], sizes = [16, 64], strides = [1, 1]} : vector<16x256xf32> to vector<16x64xf32>
    %c4 = arith.constant 4 : index
    %c0_17 = arith.constant 0 : index
    %36 = vector.load %arg6[%c4, %c0_17] : memref<8x128xf32, #tpu.memory_space<vmem>>, vector<1x64xf32>
    %c5 = arith.constant 5 : index
    %c0_18 = arith.constant 0 : index
    %37 = vector.load %arg6[%c5, %c0_18] : memref<8x128xf32, #tpu.memory_space<vmem>>, vector<1x64xf32>
    %38 = vector.broadcast %36 : vector<1x64xf32> to vector<16x64xf32>
    %39 = arith.mulf %11, %38 : vector<16x64xf32>
    %cst_19 = arith.constant -2.000000e+00 : f32
    %40 = vector.broadcast %cst_19 : f32 to vector<1x64xf32>
    %41 = arith.mulf %40, %37 : vector<1x64xf32>
    %42 = vector.broadcast %41 : vector<1x64xf32> to vector<16x64xf32>
    %43 = arith.mulf %42, %8 : vector<16x64xf32>
    %44 = arith.subf %43, %35 : vector<16x64xf32>
    %45 = arith.mulf %44, %11 : vector<16x64xf32>
    %46 = tpu.concatenate %39, %45 in 1 : vector<16x64xf32>, vector<16x64xf32> -> vector<16x128xf32>
    %47 = arith.truncf %46 : vector<16x128xf32> to vector<16x128xbf16>
    %c0_20 = arith.constant 0 : index
    %c0_21 = arith.constant 0 : index
    %48 = vector.load %arg5[%c0_20, %c0_21] : memref<128x128xbf16, #tpu.memory_space<vmem>>, vector<128x128xbf16>
    %cst_22 = arith.constant dense<0.000000e+00> : vector<16x128xf32>
    %49 = tpu.matmul %47, %48, %cst_22 {dimension_numbers = #tpu.dot_dimension_numbers<[1], [0], [0], [1], [0, 0, 1, 1], [], []>} : vector<16x128xbf16>, vector<128x128xbf16>, vector<16x128xf32> -> vector<16x128xf32>
    %50 = arith.subf %49, %34 : vector<16x128xf32>
    %c2 = arith.constant 2 : index
    %c0_23 = arith.constant 0 : index
    %51 = vector.load %arg6[%c2, %c0_23] : memref<8x128xf32, #tpu.memory_space<vmem>>, vector<1x128xf32>
    %52 = vector.broadcast %51 : vector<1x128xf32> to vector<16x128xf32>
    %53 = arith.subf %50, %52 : vector<16x128xf32>
    %54 = vector.extract_strided_slice %53 {offsets = [0, 0], sizes = [16, 60], strides = [1, 1]} : vector<16x128xf32> to vector<16x60xf32>
    %55 = arith.truncf %54 : vector<16x60xf32> to vector<16x60xbf16>
    %c0_24 = arith.constant 0 : index
    %c0_25 = arith.constant 0 : index
    %56 = vector.load %arg8[%c0_24, %c0_25] : memref<16x60xbf16, #tpu.memory_space<vmem>>, vector<16x60xbf16>
    tpu.vector_store %arg8[%c0_24, %c0_25], %55 {strides = array<i32>} : memref<16x60xbf16, #tpu.memory_space<vmem>>, vector<16x60xbf16>,
    %57 = vector.extract_strided_slice %53 {offsets = [0, 64], sizes = [16, 60], strides = [1, 1]} : vector<16x128xf32> to vector<16x60xf32>
    %58 = arith.truncf %57 : vector<16x60xf32> to vector<16x60xbf16>
    %c0_26 = arith.constant 0 : index
    %c0_27 = arith.constant 0 : index
    %59 = vector.load %arg9[%c0_26, %c0_27] : memref<16x60xbf16, #tpu.memory_space<vmem>>, vector<16x60xbf16>
    tpu.vector_store %arg9[%c0_26, %c0_27], %58 {strides = array<i32>} : memref<16x60xbf16, #tpu.memory_space<vmem>>, vector<16x60xbf16>,
    return
  }
  func.func @transform_0(%arg0: i32) -> (i32, i32) {
    %c0_i32 = arith.constant 0 : i32
    %c0_i32_0 = arith.constant 0 : i32
    return %arg0, %c0_i32 : i32, i32
  }
  func.func @transform_1(%arg0: i32) -> (i32, i32) {
    %c0_i32 = arith.constant 0 : i32
    %c0_i32_0 = arith.constant 0 : i32
    %c0_i32_1 = arith.constant 0 : i32
    return %c0_i32, %c0_i32_0 : i32, i32
  }
  func.func @transform_2(%arg0: i32) -> (i32, i32) {
    %c0_i32 = arith.constant 0 : i32
    %c0_i32_0 = arith.constant 0 : i32
    %c0_i32_1 = arith.constant 0 : i32
    return %c0_i32, %c0_i32_0 : i32, i32
  }
  func.func @transform_3(%arg0: i32) -> (i32, i32) {
    %c0_i32 = arith.constant 0 : i32
    %c0_i32_0 = arith.constant 0 : i32
    %c0_i32_1 = arith.constant 0 : i32
    return %c0_i32, %c0_i32_0 : i32, i32
  }
  func.func @transform_4(%arg0: i32) -> (i32, i32) {
    %c0_i32 = arith.constant 0 : i32
    %c0_i32_0 = arith.constant 0 : i32
    %c0_i32_1 = arith.constant 0 : i32
    return %c0_i32, %c0_i32_0 : i32, i32
  }
  func.func @transform_5(%arg0: i32) -> (i32, i32) {
    %c0_i32 = arith.constant 0 : i32
    %c0_i32_0 = arith.constant 0 : i32
    %c0_i32_1 = arith.constant 0 : i32
    return %c0_i32, %c0_i32_0 : i32, i32
  }
  func.func @transform_6(%arg0: i32) -> (i32, i32) {
    %c0_i32 = arith.constant 0 : i32
    %c0_i32_0 = arith.constant 0 : i32
    return %arg0, %c0_i32 : i32, i32
  }
  func.func @transform_7(%arg0: i32) -> (i32, i32) {
    %c0_i32 = arith.constant 0 : i32
    %c0_i32_0 = arith.constant 0 : i32
    return %arg0, %c0_i32 : i32, i32
  }
  func.func @transform_8(%arg0: i32) -> (i32, i32) {
    %c0_i32 = arith.constant 0 : i32
    %c0_i32_0 = arith.constant 0 : i32
    return %arg0, %c0_i32 : i32, i32
  }
}

</mosaic_0001>

<llo_original>
// kernel: _lambda_.1
$region0: #{_lambda_.1}
  #allocation0 [shape = 'u32[]', space=smem, size = 0x4, offset = 0x4, fixed_abs, tag = 'smem constant byte address 0x4 - core index']
  #allocation1 [shape = 'u32[144,128]{1,0:T(1,128)}', space=vmem, size = 0x12000, scoped, tag = 'internal scratch']
  %s0 = inlined_call_operand.vmem [shape: f32[16,60], index: 0, kind: input, shape index: {}]
  %s1 = inlined_call_operand.vmem [shape: bf16[60,128], index: 1, kind: input, shape index: {}]
  %s2 = inlined_call_operand.vmem [shape: bf16[64,128], index: 2, kind: input, shape index: {}]
  %s3 = inlined_call_operand.vmem [shape: bf16[128,256], index: 3, kind: input, shape index: {}]
  %s4 = inlined_call_operand.vmem [shape: bf16[128,128], index: 4, kind: input, shape index: {}]
  %s5 = inlined_call_operand.vmem [shape: f32[8,128], index: 5, kind: input, shape index: {}]
  %s6 = inlined_call_operand.hbm [shape: bf16[16,10], index: 6, kind: output, shape index: {0}]
  %s7 = inlined_call_operand.hbm [shape: bf16[16,60], index: 7, kind: output, shape index: {1}]
  %s8 = inlined_call_operand.hbm [shape: bf16[16,60], index: 8, kind: output, shape index: {2}]
  %9 = xla_tuple %s6, %s7, %s8
  %s10 = sld [smem:[#allocation0]]
  $region50: #{_lambda_.1} parent=0
    _
  %s12 = ssub.s32 1, %s10
  %s13 = scalar_select 0, %s12, %s10
  $region1: #{_lambda_.1} parent=0
    #allocation2 [shape = 'u8[4096]{0}', space=vmem, size = 0x1000, scoped, tag = 'output window, operand 0, single buffered']
    #allocation3 [shape = 's32[1]{0}', space=sflag, size = 0x4, scoped, tag = 'scoped memory for _lambda_.1']
    #allocation4 [shape = 'u8[4096]{0}', space=vmem, size = 0x1000, scoped, tag = 'output window, operand 1, single buffered']
    #allocation5 [shape = 's32[1]{0}', space=sflag, size = 0x4, scoped, tag = 'scoped memory for _lambda_.1']
    #allocation6 [shape = 'u8[4096]{0}', space=vmem, size = 0x1000, scoped, tag = 'output window, operand 2, single buffered']
    %14 = vsyncpa [#allocation3], 0
    %15 = vsyncpa [#allocation5], 0
    // Predicated region
    $region2: #{_lambda_.1} parent=1 // pred_check
      _
    $region3: #{_lambda_.1} parent=1 // pred_check_branch
      %17 = sbr.rel (0) target = $region5
    $region4: #{_lambda_.1} parent=1 // pred_region
      _
    $region5: #{_lambda_.1} parent=1 // pred_fallthru
      _
    // Predicated region
    $region6: #{_lambda_.1} parent=1 // pred_check
      _
    $region7: #{_lambda_.1} parent=1 // pred_check_branch
      %19 = sbr.rel (0) target = $region9
    $region8: #{_lambda_.1} parent=1 // pred_region
      _
    $region9: #{_lambda_.1} parent=1 // pred_fallthru
      _
    // Predicated region
    $region10: #{_lambda_.1} parent=1 // pred_check
      _
    $region11: #{_lambda_.1} parent=1 // pred_check_branch
      %21 = sbr.rel (0) target = $region13
    $region12: #{_lambda_.1} parent=1 // pred_region
      _
    $region13: #{_lambda_.1} parent=1 // pred_fallthru
      _
    // Predicated region
    $region14: #{_lambda_.1} parent=1 // pred_check
      _
    $region15: #{_lambda_.1} parent=1 // pred_check_branch
      %23 = sbr.rel (0) target = $region17
    $region16: #{_lambda_.1} parent=1 // pred_region
      _
    $region17: #{_lambda_.1} parent=1 // pred_fallthru
      _
    // Predicated region
    $region18: #{_lambda_.1} parent=1 // pred_check
      _
    $region19: #{_lambda_.1} parent=1 // pred_check_branch
      %25 = sbr.rel (0) target = $region21
    $region20: #{_lambda_.1} parent=1 // pred_region
      _
    $region21: #{_lambda_.1} parent=1 // pred_fallthru
      _
    // Predicated region
    $region22: #{_lambda_.1} parent=1 // pred_check
      _
    $region23: #{_lambda_.1} parent=1 // pred_check_branch
      %27 = sbr.rel (0) target = $region25
    $region24: #{_lambda_.1} parent=1 // pred_region
      _
    $region25: #{_lambda_.1} parent=1 // pred_fallthru
      _
    %v29 = vld [vmem:[%s0] sm:$0xff]
    %v30 = vld [vmem:[%s0 + $0x8] sm:$0xff]
    %v31 = vpack.c.bf16 %v30, %v29
    %v32 = vld [vmem:[%s1] sm:$0xf]
    %v33 = vld [vmem:[%s1 + $0x4] sm:$0xf]
    %v34 = vld [vmem:[%s1 + $0x8] sm:$0xf]
    %v35 = vld [vmem:[%s1 + $0xc] sm:$0xf]
    %v36 = vld [vmem:[%s1 + $0x10] sm:$0xf]
    %v37 = vld [vmem:[%s1 + $0x14] sm:$0xf]
    %v38 = vld [vmem:[%s1 + $0x18] sm:$0xf]
    %v39 = vld [vmem:[%s1 + $0x1c] sm:$0x3]
    %v48 = vunpack.c.l.b16 %v32
    %v49 = vunpack.c.l.b16 %v33
    %v50 = vunpack.c.l.b16 %v34
    %v51 = vunpack.c.l.b16 %v35
    %v52 = vunpack.c.l.b16 %v36
    %v53 = vunpack.c.l.b16 %v37
    %v54 = vunpack.c.l.b16 %v38
    %v55 = vunpack.c.l.b16 %v39
    %v56 = vpack.c.b16 %v49, %v48
    %v57 = vpack.c.b16 %v51, %v50
    %v58 = vpack.c.b16 %v53, %v52
    %v59 = vpack.c.b16 %v55, %v54
    %vm63 = vcmask 490496
    %v65 = vsel %vm63, %v31, 0
    %vm67 = vcmask 1045504
    %v69 = vsel %vm67, %v59, 0
    %71 = vmatprep.subr.bf16.mxu0 0
    %72 = vmatpush1.bf16.msra.mxu0 %v56
    %73 = vmatprep.subr.bf16.mxu0 0
    %74 = vmatpush1.bf16.msra.mxu0 %v57
    %75 = vmatprep.subr.bf16.mxu0 0
    %76 = vmatpush1.bf16.msra.mxu0 %v58
    %77 = vmatprep.subr.bf16.mxu0 0
    %78 = vmatpush1.bf16.msra.mxu0 %v69
    %79 = vmatprep.subr.bf16.mxu0 0
    %80 = vmatpush1.bf16.msra.mxu0 0
    %81 = vmatprep.subr.bf16.mxu0 0
    %82 = vmatpush1.bf16.msra.mxu0 0
    %83 = vmatprep.subr.bf16.mxu0 0
    %84 = vmatpush1.bf16.msra.mxu0 0
    %85 = vmatprep.subr.bf16.mxu0 0
    %86 = vmatpush1.bf16.msra.mxu0 0
    %87 = vmatprep.subr.bf16.mxu0 0
    %88 = vmatpush1.bf16.msra.mxu0 0
    %89 = vmatprep.subr.bf16.mxu0 0
    %90 = vmatpush1.bf16.msra.mxu0 0
    %91 = vmatprep.subr.bf16.mxu0 0
    %92 = vmatpush1.bf16.msra.mxu0 0
    %93 = vmatprep.subr.bf16.mxu0 0
    %94 = vmatpush1.bf16.msra.mxu0 0
    %95 = vmatprep.subr.bf16.mxu0 0
    %96 = vmatpush1.bf16.msra.mxu0 0
    %97 = vmatprep.subr.bf16.mxu0 0
    %98 = vmatpush1.bf16.msra.mxu0 0
    %99 = vmatprep.subr.bf16.mxu0 0
    %100 = vmatpush1.bf16.msra.mxu0 0
    %101 = vmatprep.subr.bf16.mxu0 0
    %102 = vmatpush1.bf16.msra.mxu0 0
    %103 = vmatprep.mubr.bf16.mxu0 0
    %104 = vmatmul.mubr.bf16.gmra.mrb[0].mxu0 %v65
    %v105 = vpop.f32.mrb[0].mxu0
    %v106 = vadd.f32 0.0, %v105
    %v107 = vpop.f32.mrb[0].mxu0
    %v108 = vpop.f32.mrb[0].mxu0
    %v109 = vadd.f32 0.0, %v108
    %v110 = vpop.f32.mrb[0].mxu0
    %111 = vdwg.mxu0
    %v112 = vld [vmem:[%s5] sm:$0x1]
    %v113 = vlaneseq
    %v114 = vshrl.u32 %v113, 7
    %v115 = vsub.s32 0, %v114
    %v116 = vrot.slane %v112, %v115
    %v117 = vadd.f32 %v106, %v116
    %v118 = vadd.f32 %v109, %v116
    %v119 = vtanh.pop %v117
    %v120 = vtanh.pop %v118
    %v121 = vmul.f32 %v119, %v119
    %v122 = vmul.f32 %v120, %v120
    %v123 = vsub.f32 1.0, %v121
    %v124 = vsub.f32 1.0, %v122
    %v125 = vpack.c.bf16 %v120, %v119
    %v126 = vld [vmem:[%s2] sm:$0xf]
    %v127 = vld [vmem:[%s2 + $0x4] sm:$0xf]
    %v128 = vld [vmem:[%s2 + $0x8] sm:$0xf]
    %v129 = vld [vmem:[%s2 + $0xc] sm:$0xf]
    %v130 = vld [vmem:[%s2 + $0x10] sm:$0xf]
    %v131 = vld [vmem:[%s2 + $0x14] sm:$0xf]
    %v132 = vld [vmem:[%s2 + $0x18] sm:$0xf]
    %v133 = vld [vmem:[%s2 + $0x1c] sm:$0xf]
    %v142 = vunpack.c.l.b16 %v126
    %v143 = vunpack.c.l.b16 %v127
    %v144 = vunpack.c.l.b16 %v128
    %v145 = vunpack.c.l.b16 %v129
    %v146 = vunpack.c.l.b16 %v130
    %v147 = vunpack.c.l.b16 %v131
    %v148 = vunpack.c.l.b16 %v132
    %v149 = vunpack.c.l.b16 %v133
    %v150 = vpack.c.b16 %v143, %v142
    %v151 = vpack.c.b16 %v145, %v144
    %v152 = vpack.c.b16 %v147, %v146
    %v153 = vpack.c.b16 %v149, %v148
    %vm158 = vcmask 523264
    %v160 = vsel %vm158, %v125, 0
    %162 = vmatprep.subr.bf16.mxu0 0
    %163 = vmatpush1.bf16.msra.mxu0 %v150
    %164 = vmatprep.subr.bf16.mxu0 0
    %165 = vmatpush1.bf16.msra.mxu0 %v151
    %166 = vmatprep.subr.bf16.mxu0 0
    %167 = vmatpush1.bf16.msra.mxu0 %v152
    %168 = vmatprep.subr.bf16.mxu0 0
    %169 = vmatpush1.bf16.msra.mxu0 %v153
    %170 = vmatprep.subr.bf16.mxu0 0
    %171 = vmatpush1.bf16.msra.mxu0 0
    %172 = vmatprep.subr.bf16.mxu0 0
    %173 = vmatpush1.bf16.msra.mxu0 0
    %174 = vmatprep.subr.bf16.mxu0 0
    %175 = vmatpush1.bf16.msra.mxu0 0
    %176 = vmatprep.subr.bf16.mxu0 0
    %177 = vmatpush1.bf16.msra.mxu0 0
    %178 = vmatprep.subr.bf16.mxu0 0
    %179 = vmatpush1.bf16.msra.mxu0 0
    %180 = vmatprep.subr.bf16.mxu0 0
    %181 = vmatpush1.bf16.msra.mxu0 0
    %182 = vmatprep.subr.bf16.mxu0 0
    %183 = vmatpush1.bf16.msra.mxu0 0
    %184 = vmatprep.subr.bf16.mxu0 0
    %185 = vmatpush1.bf16.msra.mxu0 0
    %186 = vmatprep.subr.bf16.mxu0 0
    %187 = vmatpush1.bf16.msra.mxu0 0
    %188 = vmatprep.subr.bf16.mxu0 0
    %189 = vmatpush1.bf16.msra.mxu0 0
    %190 = vmatprep.subr.bf16.mxu0 0
    %191 = vmatpush1.bf16.msra.mxu0 0
    %192 = vmatprep.subr.bf16.mxu0 0
    %193 = vmatpush1.bf16.msra.mxu0 0
    %194 = vmatprep.mubr.bf16.mxu0 0
    %195 = vmatmul.mubr.bf16.gmra.mrb[0].mxu0 %v160
    %v196 = vpop.f32.mrb[0].mxu0
    %v197 = vadd.f32 0.0, %v196
    %v198 = vpop.f32.mrb[0].mxu0
    %v199 = vpop.f32.mrb[0].mxu0
    %v200 = vadd.f32 0.0, %v199
    %v201 = vpop.f32.mrb[0].mxu0
    %202 = vdwg.mxu0
    %v203 = vld [vmem:[%s5 + $0x3] sm:$0x1]
    %v204 = vlaneseq
    %v205 = vshrl.u32 %v204, 7
    %v206 = vsub.s32 0, %v205
    %v207 = vrot.slane %v203, %v206
    %v208 = vadd.f32 %v197, %v207
    %v209 = vadd.f32 %v200, %v207
    %v210 = vpack.c.bf16 %v209, %v208
    %v212 = vunpack.c.l.b16 %v210
    %v213 = vunpack.c.h.b16 %v210
    %v214 = vpack.c.b16 %v212, %v212
    %v215 = vpack.c.b16 %v213, %v213
    %vm218 = vcmask 76800
    %219 = vst.msk [vmem:[#allocation2] sm:$0xf] %vm218, %v214
    %220 = vst.msk [vmem:[#allocation2 + $0x4] sm:$0xf] %vm218, %v215
    %v221 = vadd.f32 %v106, %v197
    %v222 = vadd.f32 %v109, %v200
    %v223 = vld [vmem:[%s5 + $0x1] sm:$0x1]
    %v224 = vlaneseq
    %v225 = vshrl.u32 %v224, 7
    %v226 = vsub.s32 0, %v225
    %v227 = vrot.slane %v223, %v226
    %229 = vrot.lane.b32.xlu0 %v227, 64
    %v230 = vpop.permute.xlu0 %229
    %v232 = vadd.f32 %v221, %v230
    %v233 = vadd.f32 %v222, %v230
    %v234 = vtanh.pop %v232
    %v235 = vtanh.pop %v233
    %v236 = vmul.f32 %v234, %v234
    %v237 = vmul.f32 %v235, %v235
    %v238 = vsub.f32 1.0, %v236
    %v239 = vsub.f32 1.0, %v237
    %242 = vrot.lane.b32.xlu0 %v234, 64
    %v243 = vpop.permute.xlu0 %242
    %244 = vrot.lane.b32.xlu0 %v235, 64
    %v245 = vpop.permute.xlu0 %244
    %v248 = vsel %vm158, %v243, %v238
    %v249 = vsel %vm158, %v245, %v239
    %v250 = vpack.c.bf16 %v249, %v248
    %v251 = vld [vmem:[%s3] sm:$0xff]
    %v252 = vld [vmem:[%s3 + $0x8] sm:$0xff]
    %v253 = vld [vmem:[%s3 + $0x10] sm:$0xff]
    %v254 = vld [vmem:[%s3 + $0x18] sm:$0xff]
    %v255 = vld [vmem:[%s3 + $0x20] sm:$0xff]
    %v256 = vld [vmem:[%s3 + $0x28] sm:$0xff]
    %v257 = vld [vmem:[%s3 + $0x30] sm:$0xff]
    %v258 = vld [vmem:[%s3 + $0x38] sm:$0xff]
    %v259 = vld [vmem:[%s3 + $0x40] sm:$0xff]
    %v260 = vld [vmem:[%s3 + $0x48] sm:$0xff]
    %v261 = vld [vmem:[%s3 + $0x50] sm:$0xff]
    %v262 = vld [vmem:[%s3 + $0x58] sm:$0xff]
    %v263 = vld [vmem:[%s3 + $0x60] sm:$0xff]
    %v264 = vld [vmem:[%s3 + $0x68] sm:$0xff]
    %v265 = vld [vmem:[%s3 + $0x70] sm:$0xff]
    %v266 = vld [vmem:[%s3 + $0x78] sm:$0xff]
    %v283 = vunpack.c.l.b16 %v251
    %v284 = vunpack.c.h.b16 %v251
    %v285 = vunpack.c.l.b16 %v252
    %v286 = vunpack.c.h.b16 %v252
    %v287 = vunpack.c.l.b16 %v253
    %v288 = vunpack.c.h.b16 %v253
    %v289 = vunpack.c.l.b16 %v254
    %v290 = vunpack.c.h.b16 %v254
    %v291 = vunpack.c.l.b16 %v255
    %v292 = vunpack.c.h.b16 %v255
    %v293 = vunpack.c.l.b16 %v256
    %v294 = vunpack.c.h.b16 %v256
    %v295 = vunpack.c.l.b16 %v257
    %v296 = vunpack.c.h.b16 %v257
    %v297 = vunpack.c.l.b16 %v258
    %v298 = vunpack.c.h.b16 %v258
    %v299 = vunpack.c.l.b16 %v259
    %v300 = vunpack.c.h.b16 %v259
    %v301 = vunpack.c.l.b16 %v260
    %v302 = vunpack.c.h.b16 %v260
    %v303 = vunpack.c.l.b16 %v261
    %v304 = vunpack.c.h.b16 %v261
    %v305 = vunpack.c.l.b16 %v262
    %v306 = vunpack.c.h.b16 %v262
    %v307 = vunpack.c.l.b16 %v263
    %v308 = vunpack.c.h.b16 %v263
    %v309 = vunpack.c.l.b16 %v264
    %v310 = vunpack.c.h.b16 %v264
    %v311 = vunpack.c.l.b16 %v265
    %v312 = vunpack.c.h.b16 %v265
    %v313 = vunpack.c.l.b16 %v266
    %v314 = vunpack.c.h.b16 %v266
    %v315 = vpack.c.b16 %v285, %v283
    %v316 = vpack.c.b16 %v286, %v284
    %v317 = vpack.c.b16 %v289, %v287
    %v318 = vpack.c.b16 %v290, %v288
    %v319 = vpack.c.b16 %v293, %v291
    %v320 = vpack.c.b16 %v294, %v292
    %v321 = vpack.c.b16 %v297, %v295
    %v322 = vpack.c.b16 %v298, %v296
    %v323 = vpack.c.b16 %v301, %v299
    %v324 = vpack.c.b16 %v302, %v300
    %v325 = vpack.c.b16 %v305, %v303
    %v326 = vpack.c.b16 %v306, %v304
    %v327 = vpack.c.b16 %v309, %v307
    %v328 = vpack.c.b16 %v310, %v308
    %v329 = vpack.c.b16 %v313, %v311
    %v330 = vpack.c.b16 %v314, %v312
    %347 = vmatprep.subr.bf16.mxu0 %v316
    %348 = vmatpush1.bf16.msra.mxu0 %v315
    %349 = vmatprep.subr.bf16.mxu0 %v318
    %350 = vmatpush1.bf16.msra.mxu0 %v317
    %351 = vmatprep.subr.bf16.mxu0 %v320
    %352 = vmatpush1.bf16.msra.mxu0 %v319
    %353 = vmatprep.subr.bf16.mxu0 %v322
    %354 = vmatpush1.bf16.msra.mxu0 %v321
    %355 = vmatprep.subr.bf16.mxu0 %v324
    %356 = vmatpush1.bf16.msra.mxu0 %v323
    %357 = vmatprep.subr.bf16.mxu0 %v326
    %358 = vmatpush1.bf16.msra.mxu0 %v325
    %359 = vmatprep.subr.bf16.mxu0 %v328
    %360 = vmatpush1.bf16.msra.mxu0 %v327
    %361 = vmatprep.subr.bf16.mxu0 %v330
    %362 = vmatpush1.bf16.msra.mxu0 %v329
    %363 = vmatprep.subr.bf16.mxu0 0
    %364 = vmatpush1.bf16.msra.mxu0 0
    %365 = vmatprep.subr.bf16.mxu0 0
    %366 = vmatpush1.bf16.msra.mxu0 0
    %367 = vmatprep.subr.bf16.mxu0 0
    %368 = vmatpush1.bf16.msra.mxu0 0
    %369 = vmatprep.subr.bf16.mxu0 0
    %370 = vmatpush1.bf16.msra.mxu0 0
    %371 = vmatprep.subr.bf16.mxu0 0
    %372 = vmatpush1.bf16.msra.mxu0 0
    %373 = vmatprep.subr.bf16.mxu0 0
    %374 = vmatpush1.bf16.msra.mxu0 0
    %375 = vmatprep.subr.bf16.mxu0 0
    %376 = vmatpush1.bf16.msra.mxu0 0
    %377 = vmatprep.subr.bf16.mxu0 0
    %378 = vmatpush1.bf16.msra.mxu0 0
    %379 = vmatprep.mubr.bf16.mxu0 0
    %380 = vmatmul.mubr.bf16.gmra.mrb[0].mxu0 %v250
    %v381 = vpop.f32.mrb[0].mxu0
    %v382 = vadd.f32 0.0, %v381
    %v383 = vpop.f32.mrb[0].mxu0
    %v384 = vadd.f32 0.0, %v383
    %v385 = vpop.f32.mrb[0].mxu0
    %v386 = vadd.f32 0.0, %v385
    %v387 = vpop.f32.mrb[0].mxu0
    %v388 = vadd.f32 0.0, %v387
    %389 = vdwg.mxu0
    %v390 = vld [vmem:[%s5 + $0x4] sm:$0x1]
    %v391 = vld [vmem:[%s5 + $0x5] sm:$0x1]
    %v392 = vlaneseq
    %v393 = vshrl.u32 %v392, 7
    %v394 = vsub.s32 0, %v393
    %v395 = vrot.slane %v390, %v394
    %v396 = vmul.f32 %v123, %v395
    %v397 = vmul.f32 %v124, %v395
    %v398 = vmul.f32 %v391, -2.0
    %v399 = vlaneseq
    %v400 = vshrl.u32 %v399, 7
    %v401 = vsub.s32 0, %v400
    %v402 = vrot.slane %v398, %v401
    %v403 = vmul.f32 %v402, %v119
    %v404 = vmul.f32 %v402, %v120
    %v405 = vsub.f32 %v403, %v384
    %v406 = vsub.f32 %v404, %v388
    %v407 = vmul.f32 %v405, %v123
    %v408 = vmul.f32 %v406, %v124
    %411 = vrot.lane.b32.xlu0 %v407, 64
    %v412 = vpop.permute.xlu0 %411
    %413 = vrot.lane.b32.xlu0 %v408, 64
    %v414 = vpop.permute.xlu0 %413
    %v417 = vsel %vm158, %v396, %v412
    %v418 = vsel %vm158, %v397, %v414
    %v419 = vpack.c.bf16 %v418, %v417
    %v420 = vld [vmem:[%s4] sm:$0xf]
    %v421 = vld [vmem:[%s4 + $0x4] sm:$0xf]
    %v422 = vld [vmem:[%s4 + $0x8] sm:$0xf]
    %v423 = vld [vmem:[%s4 + $0xc] sm:$0xf]
    %v424 = vld [vmem:[%s4 + $0x10] sm:$0xf]
    %v425 = vld [vmem:[%s4 + $0x14] sm:$0xf]
    %v426 = vld [vmem:[%s4 + $0x18] sm:$0xf]
    %v427 = vld [vmem:[%s4 + $0x1c] sm:$0xf]
    %v428 = vld [vmem:[%s4 + $0x20] sm:$0xf]
    %v429 = vld [vmem:[%s4 + $0x24] sm:$0xf]
    %v430 = vld [vmem:[%s4 + $0x28] sm:$0xf]
    %v431 = vld [vmem:[%s4 + $0x2c] sm:$0xf]
    %v432 = vld [vmem:[%s4 + $0x30] sm:$0xf]
    %v433 = vld [vmem:[%s4 + $0x34] sm:$0xf]
    %v434 = vld [vmem:[%s4 + $0x38] sm:$0xf]
    %v435 = vld [vmem:[%s4 + $0x3c] sm:$0xf]
    %v452 = vunpack.c.l.b16 %v420
    %v453 = vunpack.c.l.b16 %v421
    %v454 = vunpack.c.l.b16 %v422
    %v455 = vunpack.c.l.b16 %v423
    %v456 = vunpack.c.l.b16 %v424
    %v457 = vunpack.c.l.b16 %v425
    %v458 = vunpack.c.l.b16 %v426
    %v459 = vunpack.c.l.b16 %v427
    %v460 = vunpack.c.l.b16 %v428
    %v461 = vunpack.c.l.b16 %v429
    %v462 = vunpack.c.l.b16 %v430
    %v463 = vunpack.c.l.b16 %v431
    %v464 = vunpack.c.l.b16 %v432
    %v465 = vunpack.c.l.b16 %v433
    %v466 = vunpack.c.l.b16 %v434
    %v467 = vunpack.c.l.b16 %v435
    %v468 = vpack.c.b16 %v453, %v452
    %v469 = vpack.c.b16 %v455, %v454
    %v470 = vpack.c.b16 %v457, %v456
    %v471 = vpack.c.b16 %v459, %v458
    %v472 = vpack.c.b16 %v461, %v460
    %v473 = vpack.c.b16 %v463, %v462
    %v474 = vpack.c.b16 %v465, %v464
    %v475 = vpack.c.b16 %v467, %v466
    %484 = vmatprep.subr.bf16.mxu0 0
    %485 = vmatpush1.bf16.msra.mxu0 %v468
    %486 = vmatprep.subr.bf16.mxu0 0
    %487 = vmatpush1.bf16.msra.mxu0 %v469
    %488 = vmatprep.subr.bf16.mxu0 0
    %489 = vmatpush1.bf16.msra.mxu0 %v470
    %490 = vmatprep.subr.bf16.mxu0 0
    %491 = vmatpush1.bf16.msra.mxu0 %v471
    %492 = vmatprep.subr.bf16.mxu0 0
    %493 = vmatpush1.bf16.msra.mxu0 %v472
    %494 = vmatprep.subr.bf16.mxu0 0
    %495 = vmatpush1.bf16.msra.mxu0 %v473
    %496 = vmatprep.subr.bf16.mxu0 0
    %497 = vmatpush1.bf16.msra.mxu0 %v474
    %498 = vmatprep.subr.bf16.mxu0 0
    %499 = vmatpush1.bf16.msra.mxu0 %v475
    %500 = vmatprep.subr.bf16.mxu0 0
    %501 = vmatpush1.bf16.msra.mxu0 0
    %502 = vmatprep.subr.bf16.mxu0 0
    %503 = vmatpush1.bf16.msra.mxu0 0
    %504 = vmatprep.subr.bf16.mxu0 0
    %505 = vmatpush1.bf16.msra.mxu0 0
    %506 = vmatprep.subr.bf16.mxu0 0
    %507 = vmatpush1.bf16.msra.mxu0 0
    %508 = vmatprep.subr.bf16.mxu0 0
    %509 = vmatpush1.bf16.msra.mxu0 0
    %510 = vmatprep.subr.bf16.mxu0 0
    %511 = vmatpush1.bf16.msra.mxu0 0
    %512 = vmatprep.subr.bf16.mxu0 0
    %513 = vmatpush1.bf16.msra.mxu0 0
    %514 = vmatprep.subr.bf16.mxu0 0
    %515 = vmatpush1.bf16.msra.mxu0 0
    %516 = vmatprep.mubr.bf16.mxu0 0
    %517 = vmatmul.mubr.bf16.gmra.mrb[0].mxu0 %v419
    %v518 = vpop.f32.mrb[0].mxu0
    %v519 = vadd.f32 0.0, %v518
    %v520 = vpop.f32.mrb[0].mxu0
    %v521 = vpop.f32.mrb[0].mxu0
    %v522 = vadd.f32 0.0, %v521
    %v523 = vpop.f32.mrb[0].mxu0
    %524 = vdwg.mxu0
    %v525 = vsub.f32 %v519, %v382
    %v526 = vsub.f32 %v522, %v386
    %v527 = vld [vmem:[%s5 + $0x2] sm:$0x1]
    %v528 = vlaneseq
    %v529 = vshrl.u32 %v528, 7
    %v530 = vsub.s32 0, %v529
    %v531 = vrot.slane %v527, %v530
    %v532 = vsub.f32 %v525, %v531
    %v533 = vsub.f32 %v526, %v531
    %v534 = vpack.c.bf16 %v533, %v532
    %v536 = vunpack.c.l.b16 %v534
    %v537 = vunpack.c.h.b16 %v534
    %v538 = vpack.c.b16 %v536, %v536
    %v539 = vpack.c.b16 %v537, %v537
    %vm542 = vcmask 486400
    %543 = vst.msk [vmem:[#allocation4] sm:$0xf] %vm542, %v538
    %544 = vst.msk [vmem:[#allocation4 + $0x4] sm:$0xf] %vm542, %v539
    %545 = vrot.lane.b32.xlu0 %v538, 64
    %v546 = vpop.permute.xlu0 %545
    %547 = vrot.lane.b32.xlu0 %v539, 64
    %v548 = vpop.permute.xlu0 %547
    %551 = vst.msk [vmem:[#allocation6] sm:$0xf] %vm542, %v546
    %552 = vst.msk [vmem:[#allocation6 + $0x4] sm:$0xf] %vm542, %v548
    // Predicated region
    $region26: #{_lambda_.1} parent=1 // pred_check
      _
    $region27: #{_lambda_.1} parent=1 // pred_check_branch
      %554 = sbr.rel (0) target = $region29
    $region28: #{_lambda_.1} parent=1 // pred_region
      %s556 = ssub.s32 128, 128
      %557 = vsyncadd [#allocation3], %s556
      %s558 = sshll.u32 [#allocation2], 4
      %s559 = int_to_ptr.vmem [resolvable:$true] %s558
      %564 = dma.vmem_to_hbm [thread:$0]  %s559, 128, %s6, [#allocation3], 64, 64, 4
    $region29: #{_lambda_.1} parent=1 // pred_fallthru
      _
    // Predicated region
    $region30: #{_lambda_.1} parent=1 // pred_check
      _
    $region31: #{_lambda_.1} parent=1 // pred_check_branch
      %566 = sbr.rel (0) target = $region33
    $region32: #{_lambda_.1} parent=1 // pred_region
      %s568 = ssub.s32 128, 128
      %569 = vsyncadd [#allocation5], %s568
      %s570 = sshll.u32 [#allocation4], 4
      %s571 = int_to_ptr.vmem [resolvable:$true] %s570
      %576 = dma.vmem_to_hbm [thread:$0]  %s571, 128, %s7, [#allocation5], 64, 64, 4
    $region33: #{_lambda_.1} parent=1 // pred_fallthru
      _
    // Predicated region
    $region34: #{_lambda_.1} parent=1 // pred_check
      _
    $region35: #{_lambda_.1} parent=1 // pred_check_branch
      %578 = sbr.rel (0) target = $region37
    $region36: #{_lambda_.1} parent=1 // pred_region
      %s580 = ssub.s32 128, 128
      %581 = vsyncadd [#allocation5], %s580
      %s582 = sshll.u32 [#allocation6], 4
      %s583 = int_to_ptr.vmem [resolvable:$true] %s582
      %588 = dma.vmem_to_hbm [thread:$0]  %s583, 128, %s8, [#allocation5], 64, 64, 4
    $region37: #{_lambda_.1} parent=1 // pred_fallthru
      _
    // Predicated region
    $region38: #{_lambda_.1} parent=1 // pred_check
      _
    $region39: #{_lambda_.1} parent=1 // pred_check_branch
      %590 = sbr.rel (0) target = $region41
    $region40: #{_lambda_.1} parent=1 // pred_region
      %591 = dma.done [#allocation3], 128
    $region41: #{_lambda_.1} parent=1 // pred_fallthru
      _
    // Predicated region
    $region42: #{_lambda_.1} parent=1 // pred_check
      _
    $region43: #{_lambda_.1} parent=1 // pred_check_branch
      %593 = sbr.rel (0) target = $region45
    $region44: #{_lambda_.1} parent=1 // pred_region
      %594 = dma.done [#allocation5], 128
    $region45: #{_lambda_.1} parent=1 // pred_fallthru
      _
    // Predicated region
    $region46: #{_lambda_.1} parent=1 // pred_check
      _
    $region47: #{_lambda_.1} parent=1 // pred_check_branch
      %596 = sbr.rel (0) target = $region49
    $region48: #{_lambda_.1} parent=1 // pred_region
      %597 = dma.done [#allocation5], 128
    $region49: #{_lambda_.1} parent=1 // pred_fallthru
      _
    %598 = vsyncpa [#allocation3], 1
    %599 = vsyncpa [#allocation5], 1

</llo_original>
